<compile_context>
chip_gen: v6e
topology: v6e:2x2x1
jax: 0.10.0
libtpu: 0.0.40
codegen_flags: <defaults>
</compile_context>

<pallas_src>
import functools

import jax
import jax.numpy as jnp
from jax.experimental import pallas as pl
from jax.experimental.pallas import tpu as pltpu


def _mlp_extractor_kernel(obs_ref, w1_ref, b1_ref, w2p_ref, b2p_ref,
                          w2v_ref, b2v_ref, pi_ref, vf_ref):
    """Fused policy+value two-layer tanh MLP for one batch tile.

    obs_ref : (tile, D)   compute dtype
    w1_ref  : (D, 2H)     [W1_pi | W1_vf], compute dtype
    b1_ref  : (1, 2H)     f32
    w2p_ref : (2H, H)     [[W2_pi], [0]],  compute dtype
    b2p_ref : (1, H)      f32
    w2v_ref : (2H, H)     [[0], [W2_vf]],  compute dtype
    b2v_ref : (1, H)      f32
    pi_ref  : (tile, H)   latent_pi (written directly, no wrapper slice)
    vf_ref  : (tile, H)   latent_vf
    """
    # Layer 1: both heads fused into one 128-lane-wide MXU matmul, f32 accum.
    h = jnp.tanh(
        jnp.dot(obs_ref[...], w1_ref[...], preferred_element_type=jnp.float32)
        + b1_ref[...])
    h_c = h.astype(w2p_ref.dtype)
    # Layer 2: two (tile,2H)x(2H,H) matmuls; zero-padded rows select each head.
    pi_ref[...] = jnp.tanh(
        jnp.dot(h_c, w2p_ref[...], preferred_element_type=jnp.float32)
        + b2p_ref[...]).astype(pi_ref.dtype)
    vf_ref[...] = jnp.tanh(
        jnp.dot(h_c, w2v_ref[...], preferred_element_type=jnp.float32)
        + b2v_ref[...]).astype(vf_ref.dtype)


def init_params(key, state_dim, hidden=64, dtype=jnp.float32):
    """Deterministic parameter init (PyTorch-Linear-like uniform scaling)."""
    keys = jax.random.split(key, 8)

    def linear(kw, kb, fan_in, fan_out):
        bound = 1.0 / jnp.sqrt(jnp.array(fan_in, jnp.float32))
        w = jax.random.uniform(kw, (fan_in, fan_out), dtype, -bound, bound)
        b = jax.random.uniform(kb, (1, fan_out), dtype, -bound, bound)
        return w, b

    w1p, b1p = linear(keys[0], keys[1], state_dim, hidden)
    w2p, b2p = linear(keys[2], keys[3], hidden, hidden)
    w1v, b1v = linear(keys[4], keys[5], state_dim, hidden)
    w2v, b2v = linear(keys[6], keys[7], hidden, hidden)
    return dict(w1p=w1p, b1p=b1p, w2p=w2p, b2p=b2p,
                w1v=w1v, b1v=b1v, w2v=w2v, b2v=b2v)


def _round_up(x, m):
    return ((x + m - 1) // m) * m


@functools.partial(jax.jit, static_argnames=("batch_tile", "compute_dtype"))
def mlp_extractor_forward(obs, params, batch_tile=4096,
                          compute_dtype=jnp.float32):
    """Pallas implementation of MlpExtractor.forward -> (latent_pi, latent_vf)."""
    # nn.Flatten(1, -1) glue for 3-D observations.
    if obs.ndim == 3:
        obs = obs.reshape(obs.shape[0], -1)
    B, D = obs.shape
    H = params["w1p"].shape[1]          # 64
    out_dtype = obs.dtype               # f32 in -> f32 out (module semantics)
    cdt = jnp.dtype(compute_dtype)

    # ---- fuse the two heads (traced once under jit; negligible cost) ----
    w1 = jnp.concatenate([params["w1p"], params["w1v"]], axis=1).astype(cdt)   # (D,2H)
    b1 = jnp.concatenate([params["b1p"], params["b1v"]], axis=1).astype(jnp.float32)
    zeros_h = jnp.zeros((H, H), cdt)
    w2p = jnp.concatenate([params["w2p"].astype(cdt), zeros_h], axis=0)        # (2H,H)
    w2v = jnp.concatenate([zeros_h, params["w2v"].astype(cdt)], axis=0)        # (2H,H)
    b2p = params["b2p"].astype(jnp.float32)                                    # (1,H)
    b2v = params["b2v"].astype(jnp.float32)                                    # (1,H)
    obs_c = obs.astype(cdt)

    # ---- batch tiling: big balanced tiles; >=2 grid steps for v7x dual-TC ----
    min_steps = 2 if B >= 64 else 1
    steps = max(pl.cdiv(B, batch_tile), min_steps)
    tile = _round_up(pl.cdiv(B, steps), 8)      # sublane-aligned
    if tile >= B:
        tile = B                                # single full-batch block
    grid = (pl.cdiv(B, tile),)

    obs_spec = pl.BlockSpec((tile, D), lambda i: (i, 0))
    out_spec = pl.BlockSpec((tile, H), lambda i: (i, 0))

    def rep_spec(shape):
        return pl.BlockSpec(shape, lambda i: (0, 0))

    # Only raise the scoped-VMEM limit if a huge tile / wide D actually needs it
    # (keeps the v5e 16 MiB default untouched for normal shapes).
    itemsize = cdt.itemsize
    per_step = 2 * (tile * D * itemsize + 2 * tile * H * 4)   # double-buffered
    weight_bytes = ((w1.size + w2p.size + w2v.size) * itemsize
                    + (b1.size + b2p.size + b2v.size) * 4)
    cp_kwargs = dict(dimension_semantics=("parallel",))
    needed = per_step + 2 * weight_bytes + (2 << 20)
    if needed > 12 * 1024 * 1024:
        cp_kwargs["vmem_limit_bytes"] = min(needed, 48 * 1024 * 1024)

    latent_pi, latent_vf = pl.pallas_call(
        _mlp_extractor_kernel,
        out_shape=(jax.ShapeDtypeStruct((B, H), out_dtype),
                   jax.ShapeDtypeStruct((B, H), out_dtype)),
        grid=grid,
        in_specs=[obs_spec,
                  rep_spec(w1.shape), rep_spec(b1.shape),
                  rep_spec(w2p.shape), rep_spec(b2p.shape),
                  rep_spec(w2v.shape), rep_spec(b2v.shape)],
        out_specs=(out_spec, out_spec),
        compiler_params=pltpu.CompilerParams(**cp_kwargs),
    )(obs_c, w1, b1, w2p, b2p, w2v, b2v)
    return latent_pi, latent_vf


def mlp_extractor_forward_actor(obs, params, **kw):
    # TODO(synk): actor-only path still computes both heads (fused kernel).
    return mlp_extractor_forward(obs, params, **kw)[0]


def mlp_extractor_forward_critic(obs, params, **kw):
    # TODO(synk): critic-only path still computes both heads (fused kernel).
    return mlp_extractor_forward(obs, params, **kw)[1]


def _reference_forward(obs, params):
    """Plain-JAX reference mirroring the PyTorch module (for verification)."""
    if obs.ndim == 3:
        obs = obs.reshape(obs.shape[0], -1)
    h_pi = jnp.tanh(obs @ params["w1p"] + params["b1p"])
    pi = jnp.tanh(h_pi @ params["w2p"] + params["b2p"])
    h_vf = jnp.tanh(obs @ params["w1v"] + params["b1v"])
    vf = jnp.tanh(h_vf @ params["w2v"] + params["b2v"])
    return pi, vf


if __name__ == "__main__":
    key = jax.random.PRNGKey(0)
    k_obs, k_obs3, k_obs_big, k_obs_wide, k_par = jax.random.split(key, 5)

    state_dim, hidden = 32, 64
    params = init_params(k_par, state_dim, hidden)

    # --- small 2-D observation batch (single grid step) ---
    batch = 8
    obs = jax.random.normal(k_obs, (batch, state_dim), jnp.float32)
    latent_pi, latent_vf = mlp_extractor_forward(obs, params)
    jax.block_until_ready((latent_pi, latent_vf))
    ref_pi, ref_vf = _reference_forward(obs, params)
    assert latent_pi.shape == (batch, hidden) and latent_vf.shape == (batch, hidden)
    assert jnp.allclose(latent_pi, ref_pi, atol=1e-5, rtol=1e-5)
    assert jnp.allclose(latent_vf, ref_vf, atol=1e-5, rtol=1e-5)

    # --- 3-D observation (exercises nn.Flatten(1, -1) path, B < 8) ---
    obs3 = jax.random.normal(k_obs3, (4, 8, 4), jnp.float32)  # flattens to (4, 32)
    pi3, vf3 = mlp_extractor_forward(obs3, params)
    jax.block_until_ready((pi3, vf3))
    ref_pi3, ref_vf3 = _reference_forward(obs3, params)
    assert jnp.allclose(pi3, ref_pi3, atol=1e-5, rtol=1e-5)
    assert jnp.allclose(vf3, ref_vf3, atol=1e-5, rtol=1e-5)

    # --- larger batch with a partial last tile (grid > 1, masked last block) ---
    batch_big = 20
    obs_big = jax.random.normal(k_obs_big, (batch_big, state_dim), jnp.float32)
    pi_b, vf_b = mlp_extractor_forward(obs_big, params, batch_tile=8)
    jax.block_until_ready((pi_b, vf_b))
    ref_pi_b, ref_vf_b = _reference_forward(obs_big, params)
    assert jnp.allclose(pi_b, ref_pi_b, atol=1e-5, rtol=1e-5)
    assert jnp.allclose(vf_b, ref_vf_b, atol=1e-5, rtol=1e-5)

    # --- B >= 64: exercises the >=2-step (dual-TC) balanced-tile path ---
    batch_wide = 100
    obs_wide = jax.random.normal(k_obs_wide, (batch_wide, state_dim), jnp.float32)
    pi_w, vf_w = mlp_extractor_forward(obs_wide, params)
    jax.block_until_ready((pi_w, vf_w))
    ref_pi_w, ref_vf_w = _reference_forward(obs_wide, params)
    assert jnp.allclose(pi_w, ref_pi_w, atol=1e-5, rtol=1e-5)
    assert jnp.allclose(vf_w, ref_vf_w, atol=1e-5, rtol=1e-5)

    # --- optional bf16 operand path (halves operand DMA bytes; looser tol) ---
    pi_h, vf_h = mlp_extractor_forward(obs_wide, params,
                                       compute_dtype=jnp.bfloat16)
    jax.block_until_ready((pi_h, vf_h))
    assert jnp.allclose(pi_h, ref_pi_w, atol=5e-2, rtol=5e-2)
    assert jnp.allclose(vf_h, ref_vf_w, atol=5e-2, rtol=5e-2)

    print("KERNEL_OK")
</pallas_src>

<mosaic_0001>
module attributes {stable_mosaic.version = 11 : i64} {
  func.func @_mlp_extractor_kernel(%arg0: i32, %arg1: memref<8x32xf32, #tpu.memory_space<vmem>>, %arg2: memref<32x128xf32, #tpu.memory_space<vmem>>, %arg3: memref<1x128xf32, #tpu.memory_space<vmem>>, %arg4: memref<128x64xf32, #tpu.memory_space<vmem>>, %arg5: memref<1x64xf32, #tpu.memory_space<vmem>>, %arg6: memref<128x64xf32, #tpu.memory_space<vmem>>, %arg7: memref<1x64xf32, #tpu.memory_space<vmem>>, %arg8: memref<8x64xf32, #tpu.memory_space<vmem>>, %arg9: memref<8x64xf32, #tpu.memory_space<vmem>>) attributes {dimension_semantics = [#tpu.dimension_semantics<parallel>], iteration_bounds = array<i64: 1>, scalar_prefetch = 0 : i64, scratch_operands = 0 : i64, tpu.core_type = #tpu.core_type<tc>, window_params = [{transform_indices = @transform_0, window_bounds = array<i64: 8, 32>}, {pipeline_mode = #tpu.pipeline_mode<synchronous>, transform_indices = @transform_1, window_bounds = array<i64: 32, 128>}, {pipeline_mode = #tpu.pipeline_mode<synchronous>, transform_indices = @transform_2, window_bounds = array<i64: 1, 128>}, {pipeline_mode = #tpu.pipeline_mode<synchronous>, transform_indices = @transform_3, window_bounds = array<i64: 128, 64>}, {pipeline_mode = #tpu.pipeline_mode<synchronous>, transform_indices = @transform_4, window_bounds = array<i64: 1, 64>}, {pipeline_mode = #tpu.pipeline_mode<synchronous>, transform_indices = @transform_5, window_bounds = array<i64: 128, 64>}, {pipeline_mode = #tpu.pipeline_mode<synchronous>, transform_indices = @transform_6, window_bounds = array<i64: 1, 64>}, {transform_indices = @transform_7, window_bounds = array<i64: 8, 64>}, {transform_indices = @transform_8, window_bounds = array<i64: 8, 64>}]} {
    %c0 = arith.constant 0 : index
    %c0_0 = arith.constant 0 : index
    %0 = vector.load %arg1[%c0, %c0_0] : memref<8x32xf32, #tpu.memory_space<vmem>>, vector<8x32xf32>
    %c0_1 = arith.constant 0 : index
    %c0_2 = arith.constant 0 : index
    %1 = vector.load %arg2[%c0_1, %c0_2] : memref<32x128xf32, #tpu.memory_space<vmem>>, vector<32x128xf32>
    %cst = arith.constant dense<0.000000e+00> : vector<8x128xf32>
    %2 = tpu.matmul %0, %1, %cst {dimension_numbers = #tpu.dot_dimension_numbers<[1], [0], [0], [1], [0, 0, 1, 1], [], []>} : vector<8x32xf32>, vector<32x128xf32>, vector<8x128xf32> -> vector<8x128xf32>
    %c0_3 = arith.constant 0 : index
    %c0_4 = arith.constant 0 : index
    %3 = vector.load %arg3[%c0_3, %c0_4] : memref<1x128xf32, #tpu.memory_space<vmem>>, vector<1x128xf32>
    %4 = vector.broadcast %3 : vector<1x128xf32> to vector<8x128xf32>
    %5 = arith.addf %2, %4 : vector<8x128xf32>
    %6 = math.tanh %5 : vector<8x128xf32>
    %c0_5 = arith.constant 0 : index
    %c0_6 = arith.constant 0 : index
    %7 = vector.load %arg4[%c0_5, %c0_6] : memref<128x64xf32, #tpu.memory_space<vmem>>, vector<128x64xf32>
    %cst_7 = arith.constant dense<0.000000e+00> : vector<8x64xf32>
    %8 = tpu.matmul %6, %7, %cst_7 {dimension_numbers = #tpu.dot_dimension_numbers<[1], [0], [0], [1], [0, 0, 1, 1], [], []>} : vector<8x128xf32>, vector<128x64xf32>, vector<8x64xf32> -> vector<8x64xf32>
    %c0_8 = arith.constant 0 : index
    %c0_9 = arith.constant 0 : index
    %9 = vector.load %arg5[%c0_8, %c0_9] : memref<1x64xf32, #tpu.memory_space<vmem>>, vector<1x64xf32>
    %10 = vector.broadcast %9 : vector<1x64xf32> to vector<8x64xf32>
    %11 = arith.addf %8, %10 : vector<8x64xf32>
    %12 = math.tanh %11 : vector<8x64xf32>
    %c0_10 = arith.constant 0 : index
    %c0_11 = arith.constant 0 : index
    %13 = vector.load %arg8[%c0_10, %c0_11] : memref<8x64xf32, #tpu.memory_space<vmem>>, vector<8x64xf32>
    tpu.vector_store %arg8[%c0_10, %c0_11], %12 {strides = array<i32>} : memref<8x64xf32, #tpu.memory_space<vmem>>, vector<8x64xf32>,
    %c0_12 = arith.constant 0 : index
    %c0_13 = arith.constant 0 : index
    %14 = vector.load %arg6[%c0_12, %c0_13] : memref<128x64xf32, #tpu.memory_space<vmem>>, vector<128x64xf32>
    %cst_14 = arith.constant dense<0.000000e+00> : vector<8x64xf32>
    %15 = tpu.matmul %6, %14, %cst_14 {dimension_numbers = #tpu.dot_dimension_numbers<[1], [0], [0], [1], [0, 0, 1, 1], [], []>} : vector<8x128xf32>, vector<128x64xf32>, vector<8x64xf32> -> vector<8x64xf32>
    %c0_15 = arith.constant 0 : index
    %c0_16 = arith.constant 0 : index
    %16 = vector.load %arg7[%c0_15, %c0_16] : memref<1x64xf32, #tpu.memory_space<vmem>>, vector<1x64xf32>
    %17 = vector.broadcast %16 : vector<1x64xf32> to vector<8x64xf32>
    %18 = arith.addf %15, %17 : vector<8x64xf32>
    %19 = math.tanh %18 : vector<8x64xf32>
    %c0_17 = arith.constant 0 : index
    %c0_18 = arith.constant 0 : index
    %20 = vector.load %arg9[%c0_17, %c0_18] : memref<8x64xf32, #tpu.memory_space<vmem>>, vector<8x64xf32>
    tpu.vector_store %arg9[%c0_17, %c0_18], %19 {strides = array<i32>} : memref<8x64xf32, #tpu.memory_space<vmem>>, vector<8x64xf32>,
    return
  }
  func.func @transform_0(%arg0: i32) -> (i32, i32) {
    %c0_i32 = arith.constant 0 : i32
    %c0_i32_0 = arith.constant 0 : i32
    return %arg0, %c0_i32 : i32, i32
  }
  func.func @transform_1(%arg0: i32) -> (i32, i32) {
    %c0_i32 = arith.constant 0 : i32
    %c0_i32_0 = arith.constant 0 : i32
    %c0_i32_1 = arith.constant 0 : i32
    return %c0_i32, %c0_i32_0 : i32, i32
  }
  func.func @transform_2(%arg0: i32) -> (i32, i32) {
    %c0_i32 = arith.constant 0 : i32
    %c0_i32_0 = arith.constant 0 : i32
    %c0_i32_1 = arith.constant 0 : i32
    return %c0_i32, %c0_i32_0 : i32, i32
  }
  func.func @transform_3(%arg0: i32) -> (i32, i32) {
    %c0_i32 = arith.constant 0 : i32
    %c0_i32_0 = arith.constant 0 : i32
    %c0_i32_1 = arith.constant 0 : i32
    return %c0_i32, %c0_i32_0 : i32, i32
  }
  func.func @transform_4(%arg0: i32) -> (i32, i32) {
    %c0_i32 = arith.constant 0 : i32
    %c0_i32_0 = arith.constant 0 : i32
    %c0_i32_1 = arith.constant 0 : i32
    return %c0_i32, %c0_i32_0 : i32, i32
  }
  func.func @transform_5(%arg0: i32) -> (i32, i32) {
    %c0_i32 = arith.constant 0 : i32
    %c0_i32_0 = arith.constant 0 : i32
    %c0_i32_1 = arith.constant 0 : i32
    return %c0_i32, %c0_i32_0 : i32, i32
  }
  func.func @transform_6(%arg0: i32) -> (i32, i32) {
    %c0_i32 = arith.constant 0 : i32
    %c0_i32_0 = arith.constant 0 : i32
    %c0_i32_1 = arith.constant 0 : i32
    return %c0_i32, %c0_i32_0 : i32, i32
  }
  func.func @transform_7(%arg0: i32) -> (i32, i32) {
    %c0_i32 = arith.constant 0 : i32
    %c0_i32_0 = arith.constant 0 : i32
    return %arg0, %c0_i32 : i32, i32
  }
  func.func @transform_8(%arg0: i32) -> (i32, i32) {
    %c0_i32 = arith.constant 0 : i32
    %c0_i32_0 = arith.constant 0 : i32
    return %arg0, %c0_i32 : i32, i32
  }
}

</mosaic_0001>

<llo_original>
// kernel: mlp_extractor_forward.1
$region0: #{mlp_extractor_forward.1}
  #allocation0 [shape = 'u32[]', space=smem, size = 0x4, offset = 0x4, fixed_abs, tag = 'smem constant byte address 0x4 - core index']
  #allocation1 [shape = 'u32[144,128]{1,0:T(1,128)}', space=vmem, size = 0x12000, scoped, tag = 'internal scratch']
  %s0 = inlined_call_operand.vmem [shape: f32[8,32], index: 0, kind: input, shape index: {}]
  %s1 = inlined_call_operand.vmem [shape: f32[32,128], index: 1, kind: input, shape index: {}]
  %s2 = inlined_call_operand.vmem [shape: f32[1,128], index: 2, kind: input, shape index: {}]
  %s3 = inlined_call_operand.vmem [shape: f32[128,64], index: 3, kind: input, shape index: {}]
  %s4 = inlined_call_operand.vmem [shape: f32[1,64], index: 4, kind: input, shape index: {}]
  %s5 = inlined_call_operand.vmem [shape: f32[128,64], index: 5, kind: input, shape index: {}]
  %s6 = inlined_call_operand.vmem [shape: f32[1,64], index: 6, kind: input, shape index: {}]
  %s7 = inlined_call_operand.hbm [shape: f32[8,64], index: 7, kind: output, shape index: {0}]
  %s8 = inlined_call_operand.hbm [shape: f32[8,64], index: 8, kind: output, shape index: {1}]
  %9 = xla_tuple %s7, %s8
  %s10 = sld [smem:[#allocation0]]
  $region46: #{mlp_extractor_forward.1} parent=0
    _
  %s12 = ssub.s32 1, %s10
  %s13 = scalar_select 0, %s12, %s10
  $region1: #{mlp_extractor_forward.1} parent=0
    #allocation2 [shape = 'u8[4096]{0}', space=vmem, size = 0x1000, scoped, tag = 'output window, operand 0, single buffered']
    #allocation3 [shape = 's32[1]{0}', space=sflag, size = 0x4, scoped, tag = 'scoped memory for mlp_extractor_forward.1']
    #allocation4 [shape = 'u8[4096]{0}', space=vmem, size = 0x1000, scoped, tag = 'output window, operand 1, single buffered']
    #allocation5 [shape = 's32[1]{0}', space=sflag, size = 0x4, scoped, tag = 'scoped memory for mlp_extractor_forward.1']
    %14 = vsyncpa [#allocation3], 0
    %15 = vsyncpa [#allocation5], 0
    // Predicated region
    $region2: #{mlp_extractor_forward.1} parent=1 // pred_check
      _
    $region3: #{mlp_extractor_forward.1} parent=1 // pred_check_branch
      %17 = sbr.rel (0) target = $region5
    $region4: #{mlp_extractor_forward.1} parent=1 // pred_region
      _
    $region5: #{mlp_extractor_forward.1} parent=1 // pred_fallthru
      _
    // Predicated region
    $region6: #{mlp_extractor_forward.1} parent=1 // pred_check
      _
    $region7: #{mlp_extractor_forward.1} parent=1 // pred_check_branch
      %19 = sbr.rel (0) target = $region9
    $region8: #{mlp_extractor_forward.1} parent=1 // pred_region
      _
    $region9: #{mlp_extractor_forward.1} parent=1 // pred_fallthru
      _
    // Predicated region
    $region10: #{mlp_extractor_forward.1} parent=1 // pred_check
      _
    $region11: #{mlp_extractor_forward.1} parent=1 // pred_check_branch
      %21 = sbr.rel (0) target = $region13
    $region12: #{mlp_extractor_forward.1} parent=1 // pred_region
      _
    $region13: #{mlp_extractor_forward.1} parent=1 // pred_fallthru
      _
    // Predicated region
    $region14: #{mlp_extractor_forward.1} parent=1 // pred_check
      _
    $region15: #{mlp_extractor_forward.1} parent=1 // pred_check_branch
      %23 = sbr.rel (0) target = $region17
    $region16: #{mlp_extractor_forward.1} parent=1 // pred_region
      _
    $region17: #{mlp_extractor_forward.1} parent=1 // pred_fallthru
      _
    // Predicated region
    $region18: #{mlp_extractor_forward.1} parent=1 // pred_check
      _
    $region19: #{mlp_extractor_forward.1} parent=1 // pred_check_branch
      %25 = sbr.rel (0) target = $region21
    $region20: #{mlp_extractor_forward.1} parent=1 // pred_region
      _
    $region21: #{mlp_extractor_forward.1} parent=1 // pred_fallthru
      _
    // Predicated region
    $region22: #{mlp_extractor_forward.1} parent=1 // pred_check
      _
    $region23: #{mlp_extractor_forward.1} parent=1 // pred_check_branch
      %27 = sbr.rel (0) target = $region25
    $region24: #{mlp_extractor_forward.1} parent=1 // pred_region
      _
    $region25: #{mlp_extractor_forward.1} parent=1 // pred_fallthru
      _
    // Predicated region
    $region26: #{mlp_extractor_forward.1} parent=1 // pred_check
      _
    $region27: #{mlp_extractor_forward.1} parent=1 // pred_check_branch
      %29 = sbr.rel (0) target = $region29
    $region28: #{mlp_extractor_forward.1} parent=1 // pred_region
      _
    $region29: #{mlp_extractor_forward.1} parent=1 // pred_fallthru
      _
    %v30 = vld [vmem:[%s0] sm:$0xff]
    %v31 = vld [vmem:[%s1] sm:$0xff]
    %v32 = vld [vmem:[%s1 + $0x8] sm:$0xff]
    %v33 = vld [vmem:[%s1 + $0x10] sm:$0xff]
    %v34 = vld [vmem:[%s1 + $0x18] sm:$0xff]
    %v35 = vld [vmem:[%s2] sm:$0x1]
    %v37 = vlaneseq
    %v38 = vshrl.u32 %v37, 7
    %v39 = vsub.s32 0, %v38
    %v40 = vrot.slane %v35, %v39
    %vm42 = vcmask 261120
    %v44 = vsel %vm42, %v30, 0
    %46 = vmatprep.subr.mxu0 0.0
    %47 = vmatpush1.msra.mxu0 0.0
    %48 = vmatprep.subr.mxu0 0.0
    %49 = vmatpush1.msra.mxu0 0.0
    %50 = vmatprep.subr.mxu0 0.0
    %51 = vmatpush1.msra.mxu0 0.0
    %52 = vmatprep.subr.mxu0 0.0
    %53 = vmatpush1.msra.mxu0 0.0
    %54 = vmatprep.subr.mxu0 0.0
    %55 = vmatpush1.msra.mxu0 0.0
    %56 = vmatprep.subr.mxu0 0.0
    %57 = vmatpush1.msra.mxu0 0.0
    %58 = vmatprep.subr.mxu0 0.0
    %59 = vmatpush1.msra.mxu0 0.0
    %60 = vmatprep.subr.mxu0 0.0
    %61 = vmatpush1.msra.mxu0 0.0
    %62 = vmatprep.subr.mxu0 0.0
    %63 = vmatpush1.msra.mxu0 0.0
    %64 = vmatprep.subr.mxu0 0.0
    %65 = vmatpush1.msra.mxu0 0.0
    %66 = vmatprep.subr.mxu0 0.0
    %67 = vmatpush1.msra.mxu0 0.0
    %68 = vmatprep.subr.mxu0 0.0
    %69 = vmatpush1.msra.mxu0 0.0
    %70 = vmatprep.subr.mxu0 0.0
    %71 = vmatpush1.msra.mxu0 %v34
    %72 = vmatprep.subr.mxu0 0.0
    %73 = vmatpush1.msra.mxu0 %v33
    %74 = vmatprep.subr.mxu0 0.0
    %75 = vmatpush1.msra.mxu0 %v32
    %76 = vmatprep.subr.mxu0 0.0
    %77 = vmatpush1.msra.mxu0 %v31
    %78 = vmatprep.subr.mxu0 0.0
    %79 = vmatpush2.msra.mxu0 0.0
    %80 = vmatprep.subr.mxu0 0.0
    %81 = vmatpush2.msra.mxu0 0.0
    %82 = vmatprep.subr.mxu0 0.0
    %83 = vmatpush2.msra.mxu0 0.0
    %84 = vmatprep.subr.mxu0 0.0
    %85 = vmatpush2.msra.mxu0 0.0
    %86 = vmatprep.subr.mxu0 0.0
    %87 = vmatpush2.msra.mxu0 0.0
    %88 = vmatprep.subr.mxu0 0.0
    %89 = vmatpush2.msra.mxu0 0.0
    %90 = vmatprep.subr.mxu0 0.0
    %91 = vmatpush2.msra.mxu0 0.0
    %92 = vmatprep.subr.mxu0 0.0
    %93 = vmatpush2.msra.mxu0 0.0
    %94 = vmatprep.subr.mxu0 0.0
    %95 = vmatpush2.msra.mxu0 0.0
    %96 = vmatprep.subr.mxu0 0.0
    %97 = vmatpush2.msra.mxu0 0.0
    %98 = vmatprep.subr.mxu0 0.0
    %99 = vmatpush2.msra.mxu0 0.0
    %100 = vmatprep.subr.mxu0 0.0
    %101 = vmatpush2.msra.mxu0 0.0
    %102 = vmatprep.subr.mxu0 0.0
    %103 = vmatpush2.msra.mxu0 0.0
    %104 = vmatprep.subr.mxu0 0.0
    %105 = vmatpush2.msra.mxu0 0.0
    %106 = vmatprep.subr.mxu0 0.0
    %107 = vmatpush2.msra.mxu0 0.0
    %108 = vmatprep.subr.mxu0 0.0
    %109 = vmatpush2.msra.mxu0 0.0
    %110 = vmatprep.mubr.f32.mxu0 0.0
    %111 = vmatmul.mubr.f32.gmra.mxu0 %v44
    %v112 = vpop.f32.mrf.mxu0
    %v113 = vadd.f32 %v40, %v112
    %v114 = vpop.f32.mrf.mxu0
    %115 = vdwg.mxu0
    %v116 = vtanh.pop %v113
    %v117 = vld [vmem:[%s3] sm:$0xff]
    %v118 = vld [vmem:[%s3 + $0x8] sm:$0xff]
    %v119 = vld [vmem:[%s3 + $0x10] sm:$0xff]
    %v120 = vld [vmem:[%s3 + $0x18] sm:$0xff]
    %v121 = vld [vmem:[%s3 + $0x20] sm:$0xff]
    %v122 = vld [vmem:[%s3 + $0x28] sm:$0xff]
    %v123 = vld [vmem:[%s3 + $0x30] sm:$0xff]
    %v124 = vld [vmem:[%s3 + $0x38] sm:$0xff]
    %v125 = vld [vmem:[%s3 + $0x40] sm:$0xff]
    %v126 = vld [vmem:[%s3 + $0x48] sm:$0xff]
    %v127 = vld [vmem:[%s3 + $0x50] sm:$0xff]
    %v128 = vld [vmem:[%s3 + $0x58] sm:$0xff]
    %v129 = vld [vmem:[%s3 + $0x60] sm:$0xff]
    %v130 = vld [vmem:[%s3 + $0x68] sm:$0xff]
    %v131 = vld [vmem:[%s3 + $0x70] sm:$0xff]
    %v132 = vld [vmem:[%s3 + $0x78] sm:$0xff]
    %v133 = vld [vmem:[%s4] sm:$0x1]
    %v135 = vlaneseq
    %v136 = vshrl.u32 %v135, 7
    %v137 = vsub.s32 0, %v136
    %v138 = vrot.slane %v133, %v137
    %140 = vmatprep.subr.mxu0 0.0
    %141 = vmatpush1.msra.mxu0 %v132
    %142 = vmatprep.subr.mxu0 0.0
    %143 = vmatpush1.msra.mxu0 %v131
    %144 = vmatprep.subr.mxu0 0.0
    %145 = vmatpush1.msra.mxu0 %v130
    %146 = vmatprep.subr.mxu0 0.0
    %147 = vmatpush1.msra.mxu0 %v129
    %148 = vmatprep.subr.mxu0 0.0
    %149 = vmatpush1.msra.mxu0 %v128
    %150 = vmatprep.subr.mxu0 0.0
    %151 = vmatpush1.msra.mxu0 %v127
    %152 = vmatprep.subr.mxu0 0.0
    %153 = vmatpush1.msra.mxu0 %v126
    %154 = vmatprep.subr.mxu0 0.0
    %155 = vmatpush1.msra.mxu0 %v125
    %156 = vmatprep.subr.mxu0 0.0
    %157 = vmatpush1.msra.mxu0 %v124
    %158 = vmatprep.subr.mxu0 0.0
    %159 = vmatpush1.msra.mxu0 %v123
    %160 = vmatprep.subr.mxu0 0.0
    %161 = vmatpush1.msra.mxu0 %v122
    %162 = vmatprep.subr.mxu0 0.0
    %163 = vmatpush1.msra.mxu0 %v121
    %164 = vmatprep.subr.mxu0 0.0
    %165 = vmatpush1.msra.mxu0 %v120
    %166 = vmatprep.subr.mxu0 0.0
    %167 = vmatpush1.msra.mxu0 %v119
    %168 = vmatprep.subr.mxu0 0.0
    %169 = vmatpush1.msra.mxu0 %v118
    %170 = vmatprep.subr.mxu0 0.0
    %171 = vmatpush1.msra.mxu0 %v117
    %172 = vmatprep.subr.mxu0 0.0
    %173 = vmatpush2.msra.mxu0 0.0
    %174 = vmatprep.subr.mxu0 0.0
    %175 = vmatpush2.msra.mxu0 0.0
    %176 = vmatprep.subr.mxu0 0.0
    %177 = vmatpush2.msra.mxu0 0.0
    %178 = vmatprep.subr.mxu0 0.0
    %179 = vmatpush2.msra.mxu0 0.0
    %180 = vmatprep.subr.mxu0 0.0
    %181 = vmatpush2.msra.mxu0 0.0
    %182 = vmatprep.subr.mxu0 0.0
    %183 = vmatpush2.msra.mxu0 0.0
    %184 = vmatprep.subr.mxu0 0.0
    %185 = vmatpush2.msra.mxu0 0.0
    %186 = vmatprep.subr.mxu0 0.0
    %187 = vmatpush2.msra.mxu0 0.0
    %188 = vmatprep.subr.mxu0 0.0
    %189 = vmatpush2.msra.mxu0 0.0
    %190 = vmatprep.subr.mxu0 0.0
    %191 = vmatpush2.msra.mxu0 0.0
    %192 = vmatprep.subr.mxu0 0.0
    %193 = vmatpush2.msra.mxu0 0.0
    %194 = vmatprep.subr.mxu0 0.0
    %195 = vmatpush2.msra.mxu0 0.0
    %196 = vmatprep.subr.mxu0 0.0
    %197 = vmatpush2.msra.mxu0 0.0
    %198 = vmatprep.subr.mxu0 0.0
    %199 = vmatpush2.msra.mxu0 0.0
    %200 = vmatprep.subr.mxu0 0.0
    %201 = vmatpush2.msra.mxu0 0.0
    %202 = vmatprep.subr.mxu0 0.0
    %203 = vmatpush2.msra.mxu0 0.0
    %204 = vmatprep.mubr.f32.mxu0 0.0
    %205 = vmatmul.mubr.f32.gmra.mxu0 %v116
    %v206 = vpop.f32.mrf.mxu0
    %v207 = vadd.f32 %v138, %v206
    %v208 = vpop.f32.mrf.mxu0
    %209 = vdwg.mxu0
    %v210 = vtanh.pop %v207
    %vm211 = vcmask 523264
    %212 = vst.msk [vmem:[#allocation2] sm:$0xff] %vm211, %v210
    %v213 = vld [vmem:[%s5] sm:$0xff]
    %v214 = vld [vmem:[%s5 + $0x8] sm:$0xff]
    %v215 = vld [vmem:[%s5 + $0x10] sm:$0xff]
    %v216 = vld [vmem:[%s5 + $0x18] sm:$0xff]
    %v217 = vld [vmem:[%s5 + $0x20] sm:$0xff]
    %v218 = vld [vmem:[%s5 + $0x28] sm:$0xff]
    %v219 = vld [vmem:[%s5 + $0x30] sm:$0xff]
    %v220 = vld [vmem:[%s5 + $0x38] sm:$0xff]
    %v221 = vld [vmem:[%s5 + $0x40] sm:$0xff]
    %v222 = vld [vmem:[%s5 + $0x48] sm:$0xff]
    %v223 = vld [vmem:[%s5 + $0x50] sm:$0xff]
    %v224 = vld [vmem:[%s5 + $0x58] sm:$0xff]
    %v225 = vld [vmem:[%s5 + $0x60] sm:$0xff]
    %v226 = vld [vmem:[%s5 + $0x68] sm:$0xff]
    %v227 = vld [vmem:[%s5 + $0x70] sm:$0xff]
    %v228 = vld [vmem:[%s5 + $0x78] sm:$0xff]
    %v229 = vld [vmem:[%s6] sm:$0x1]
    %v231 = vlaneseq
    %v232 = vshrl.u32 %v231, 7
    %v233 = vsub.s32 0, %v232
    %v234 = vrot.slane %v229, %v233
    %236 = vmatprep.subr.mxu0 0.0
    %237 = vmatpush1.msra.mxu0 %v228
    %238 = vmatprep.subr.mxu0 0.0
    %239 = vmatpush1.msra.mxu0 %v227
    %240 = vmatprep.subr.mxu0 0.0
    %241 = vmatpush1.msra.mxu0 %v226
    %242 = vmatprep.subr.mxu0 0.0
    %243 = vmatpush1.msra.mxu0 %v225
    %244 = vmatprep.subr.mxu0 0.0
    %245 = vmatpush1.msra.mxu0 %v224
    %246 = vmatprep.subr.mxu0 0.0
    %247 = vmatpush1.msra.mxu0 %v223
    %248 = vmatprep.subr.mxu0 0.0
    %249 = vmatpush1.msra.mxu0 %v222
    %250 = vmatprep.subr.mxu0 0.0
    %251 = vmatpush1.msra.mxu0 %v221
    %252 = vmatprep.subr.mxu0 0.0
    %253 = vmatpush1.msra.mxu0 %v220
    %254 = vmatprep.subr.mxu0 0.0
    %255 = vmatpush1.msra.mxu0 %v219
    %256 = vmatprep.subr.mxu0 0.0
    %257 = vmatpush1.msra.mxu0 %v218
    %258 = vmatprep.subr.mxu0 0.0
    %259 = vmatpush1.msra.mxu0 %v217
    %260 = vmatprep.subr.mxu0 0.0
    %261 = vmatpush1.msra.mxu0 %v216
    %262 = vmatprep.subr.mxu0 0.0
    %263 = vmatpush1.msra.mxu0 %v215
    %264 = vmatprep.subr.mxu0 0.0
    %265 = vmatpush1.msra.mxu0 %v214
    %266 = vmatprep.subr.mxu0 0.0
    %267 = vmatpush1.msra.mxu0 %v213
    %268 = vmatprep.subr.mxu0 0.0
    %269 = vmatpush2.msra.mxu0 0.0
    %270 = vmatprep.subr.mxu0 0.0
    %271 = vmatpush2.msra.mxu0 0.0
    %272 = vmatprep.subr.mxu0 0.0
    %273 = vmatpush2.msra.mxu0 0.0
    %274 = vmatprep.subr.mxu0 0.0
    %275 = vmatpush2.msra.mxu0 0.0
    %276 = vmatprep.subr.mxu0 0.0
    %277 = vmatpush2.msra.mxu0 0.0
    %278 = vmatprep.subr.mxu0 0.0
    %279 = vmatpush2.msra.mxu0 0.0
    %280 = vmatprep.subr.mxu0 0.0
    %281 = vmatpush2.msra.mxu0 0.0
    %282 = vmatprep.subr.mxu0 0.0
    %283 = vmatpush2.msra.mxu0 0.0
    %284 = vmatprep.subr.mxu0 0.0
    %285 = vmatpush2.msra.mxu0 0.0
    %286 = vmatprep.subr.mxu0 0.0
    %287 = vmatpush2.msra.mxu0 0.0
    %288 = vmatprep.subr.mxu0 0.0
    %289 = vmatpush2.msra.mxu0 0.0
    %290 = vmatprep.subr.mxu0 0.0
    %291 = vmatpush2.msra.mxu0 0.0
    %292 = vmatprep.subr.mxu0 0.0
    %293 = vmatpush2.msra.mxu0 0.0
    %294 = vmatprep.subr.mxu0 0.0
    %295 = vmatpush2.msra.mxu0 0.0
    %296 = vmatprep.subr.mxu0 0.0
    %297 = vmatpush2.msra.mxu0 0.0
    %298 = vmatprep.subr.mxu0 0.0
    %299 = vmatpush2.msra.mxu0 0.0
    %300 = vmatprep.mubr.f32.mxu0 0.0
    %301 = vmatmul.mubr.f32.gmra.mxu0 %v116
    %v302 = vpop.f32.mrf.mxu0
    %v303 = vadd.f32 %v234, %v302
    %v304 = vpop.f32.mrf.mxu0
    %305 = vdwg.mxu0
    %v306 = vtanh.pop %v303
    %307 = vst.msk [vmem:[#allocation4] sm:$0xff] %vm211, %v306
    // Predicated region
    $region30: #{mlp_extractor_forward.1} parent=1 // pred_check
      _
    $region31: #{mlp_extractor_forward.1} parent=1 // pred_check_branch
      %309 = sbr.rel (0) target = $region33
    $region32: #{mlp_extractor_forward.1} parent=1 // pred_region
      %s311 = ssub.s32 128, 128
      %312 = vsyncadd [#allocation3], %s311
      %s314 = sshll.u32 [#allocation2], 4
      %s315 = int_to_ptr.vmem [resolvable:$true] %s314
      %317 = dma.vmem_to_hbm [thread:$0]  %s315, 128, %s7, [#allocation3]
    $region33: #{mlp_extractor_forward.1} parent=1 // pred_fallthru
      _
    // Predicated region
    $region34: #{mlp_extractor_forward.1} parent=1 // pred_check
      _
    $region35: #{mlp_extractor_forward.1} parent=1 // pred_check_branch
      %319 = sbr.rel (0) target = $region37
    $region36: #{mlp_extractor_forward.1} parent=1 // pred_region
      %s321 = ssub.s32 128, 128
      %322 = vsyncadd [#allocation5], %s321
      %s324 = sshll.u32 [#allocation4], 4
      %s325 = int_to_ptr.vmem [resolvable:$true] %s324
      %327 = dma.vmem_to_hbm [thread:$0]  %s325, 128, %s8, [#allocation5]
    $region37: #{mlp_extractor_forward.1} parent=1 // pred_fallthru
      _
    // Predicated region
    $region38: #{mlp_extractor_forward.1} parent=1 // pred_check
      _
    $region39: #{mlp_extractor_forward.1} parent=1 // pred_check_branch
      %329 = sbr.rel (0) target = $region41
    $region40: #{mlp_extractor_forward.1} parent=1 // pred_region
      %330 = dma.done [#allocation3], 128
    $region41: #{mlp_extractor_forward.1} parent=1 // pred_fallthru
      _
    // Predicated region
    $region42: #{mlp_extractor_forward.1} parent=1 // pred_check
      _
    $region43: #{mlp_extractor_forward.1} parent=1 // pred_check_branch
      %332 = sbr.rel (0) target = $region45
    $region44: #{mlp_extractor_forward.1} parent=1 // pred_region
      %333 = dma.done [#allocation5], 128
    $region45: #{mlp_extractor_forward.1} parent=1 // pred_fallthru
      _
    %334 = vsyncpa [#allocation3], 1
    %335 = vsyncpa [#allocation5], 1

</llo_original>
